<compile_context>
chip_gen: v7x
topology: tpu7x:2x2x1
jax: 0.10.0
libtpu: 0.0.40
codegen_flags: <defaults>
</compile_context>

<pallas_src>
import numpy as np

import jax
import jax.numpy as jnp
from jax import lax
from jax.experimental import pallas as pl
from jax.experimental.pallas import tpu as pltpu

NEG_SLOPE = 0.01  # F.leaky_relu default negative slope


# ---------------------------------------------------------------------------
# Host-side (one-time, pure NumPy) lowering of conv layers to dense matrices
# acting on the channel-major flattened activation:
#   flat[b, c*L + l] == x[b, c, l]   (PyTorch NCL layout)
# ---------------------------------------------------------------------------
def _conv1d_matrix(weight, L_in, stride, padding):
    """weight: (C_out, C_in, K) -> M: (C_in*L_in, C_out*L_out), L_out."""
    w = np.asarray(weight, np.float32)
    C_out, C_in, K = w.shape
    L_out = (L_in + 2 * padding - K) // stride + 1
    M = np.zeros((C_in, L_in, C_out, L_out), np.float32)
    for t in range(L_out):
        for k in range(K):
            l = stride * t + k - padding
            if 0 <= l < L_in:
                M[:, l, :, t] += w[:, :, k].T          # (C_in, C_out)
    return M.reshape(C_in * L_in, C_out * L_out), L_out


def _convT1d_matrix(weight, L_in, stride, padding, output_padding):
    """weight: (C_in, C_out, K) -> M: (C_in*L_in, C_out*L_out), L_out."""
    w = np.asarray(weight, np.float32)
    C_in, C_out, K = w.shape
    L_out = (L_in - 1) * stride - 2 * padding + K + output_padding
    M = np.zeros((C_in, L_in, C_out, L_out), np.float32)
    for l in range(L_in):
        for k in range(K):
            t = stride * l + k - padding               # y[t] += x[l] * W[k]
            if 0 <= t < L_out:
                M[:, l, :, t] += w[:, :, k]            # (C_in, C_out)
    return M.reshape(C_in * L_in, C_out * L_out), L_out


def _flat_bias(bias, L_out):
    # flat output index is o*L_out + t  ->  repeat each channel bias L_out times
    return np.repeat(np.asarray(bias, np.float32), L_out)


def _block_diag(a, b):
    ra, ca = a.shape
    rb, cb = b.shape
    out = np.zeros((ra + rb, ca + cb), np.float32)
    out[:ra, :ca] = a
    out[ra:, ca:] = b
    return out


def _trim_skip_rows(M, C_skip, L_built, L_real):
    """Drop rows of M corresponding to the zero-padded tail (F.pad) of a skip."""
    N = M.shape[1]
    return M.reshape(C_skip, L_built, N)[:, :L_real, :].reshape(C_skip * L_real, N)


def pack_params(params, L=12):
    """Lower all conv layers to dense matrices (bf16) + flattened biases (f32).

    Called once; the per-step forward() only touches the packed tensors.
    """
    w_e1, b_e1 = params["enc1"]
    w_e2, b_e2 = params["enc2"]
    w_e3, b_e3 = params["enc3"]
    w_s1, b_s1 = params["decSig1"]
    w_s2, b_s2 = params["decSig2"]
    w_s3, b_s3 = params["decSig3"]
    w_n1, b_n1 = params["decNoi1"]
    w_n2, b_n2 = params["decNoi2"]
    w_n3, b_n3 = params["decNoi3"]

    # ---- encoder ----------------------------------------------------------
    M1, L1 = _conv1d_matrix(w_e1, L, stride=2, padding=1)     # (C_in*L, 16*L1)
    M2, L2 = _conv1d_matrix(w_e2, L1, stride=2, padding=1)    # (16*L1, 32*L2)
    M3, L3 = _conv1d_matrix(w_e3, L2, stride=2, padding=1)    # (32*L2, lat*L3)

    # ---- decoder stage 1: sig & noi share input x3 -> merge along N -------
    A1s, Ld1 = _convT1d_matrix(w_s1, L3, 2, 1, 1)
    A1n, _ = _convT1d_matrix(w_n1, L3, 2, 1, 1)
    M4 = np.concatenate([A1s, A1n], axis=1)                   # (lat*L3, 2*32*Ld1)
    assert Ld1 - L2 == 1, "model hard-codes F.pad(x2, (0, 1)); need Ld1 == L2+1"

    # ---- decoder stage 2: cat([s1|n1], pad(x2)) -> block matrices ----------
    ch2 = np.asarray(w_s2).shape[0] // 2                       # 32
    A2s, Ld2 = _convT1d_matrix(np.asarray(w_s2)[:ch2], Ld1, 2, 1, 1)
    B2s, _ = _convT1d_matrix(np.asarray(w_s2)[ch2:], Ld1, 2, 1, 1)
    A2n, _ = _convT1d_matrix(np.asarray(w_n2)[:ch2], Ld1, 2, 1, 1)
    B2n, _ = _convT1d_matrix(np.asarray(w_n2)[ch2:], Ld1, 2, 1, 1)
    A5 = _block_diag(A2s, A2n)                                 # (2*32*Ld1, 2*16*Ld2)
    C5 = np.concatenate([_trim_skip_rows(B2s, ch2, Ld1, L2),
                         _trim_skip_rows(B2n, ch2, Ld1, L2)], axis=1)
    assert Ld2 - L1 == 2, "model hard-codes F.pad(x1, (0, 2)); need Ld2 == L1+2"

    # ---- decoder stage 3: cat([s2|n2], pad(x1)) -> block matrices ----------
    ch3 = np.asarray(w_s3).shape[0] // 2                       # 16
    A3s, Ld3 = _convT1d_matrix(np.asarray(w_s3)[:ch3], Ld2, 2, 1, 1)
    B3s, _ = _convT1d_matrix(np.asarray(w_s3)[ch3:], Ld2, 2, 1, 1)
    A3n, _ = _convT1d_matrix(np.asarray(w_n3)[:ch3], Ld2, 2, 1, 1)
    B3n, _ = _convT1d_matrix(np.asarray(w_n3)[ch3:], Ld2, 2, 1, 1)
    A6 = _block_diag(A3s, A3n)                                 # (2*16*Ld2, 2*Ld3)
    C6 = np.concatenate([_trim_skip_rows(B3s, ch3, Ld2, L1),
                         _trim_skip_rows(B3n, ch3, Ld2, L1)], axis=1)

    # ---- flattened biases (f32, (1, N) for lane broadcast) ------------------
    bias1 = _flat_bias(b_e1, L1)[None, :]
    bias2 = _flat_bias(b_e2, L2)[None, :]
    bias3 = _flat_bias(b_e3, L3)[None, :]
    bias4 = np.concatenate([_flat_bias(b_s1, Ld1), _flat_bias(b_n1, Ld1)])[None, :]
    bias5 = np.concatenate([_flat_bias(b_s2, Ld2), _flat_bias(b_n2, Ld2)])[None, :]
    bias6 = np.concatenate([_flat_bias(b_s3, Ld3), _flat_bias(b_n3, Ld3)])[None, :]

    mats = tuple(jnp.asarray(m, jnp.bfloat16)
                 for m in (M1, M2, M3, M4, A5, C5, A6, C6))
    biases = tuple(jnp.asarray(b, jnp.float32)
                   for b in (bias1, bias2, bias3, bias4, bias5, bias6))
    return mats + biases


# ---------------------------------------------------------------------------
# The fused Pallas kernel: whole U-Net forward, everything resident in VMEM.
# ---------------------------------------------------------------------------
def _unet_kernel(x_ref, m1, m2, m3, m4, a5, c5, a6, c6,
                 b1, b2, b3, b4, b5, b6, out_ref):
    def mm(h, w_ref):
        # bf16 operands on the MXU, f32 accumulation.
        return jnp.dot(h.astype(jnp.bfloat16), w_ref[...],
                       preferred_element_type=jnp.float32)

    def lrelu(y):
        return jnp.where(y >= 0, y, NEG_SLOPE * y)

    x = x_ref[...].astype(jnp.float32)                     # (B, C_in*L)
    x1 = lrelu(mm(x, m1) + b1[...])                        # (B, 16*L1)
    x2 = lrelu(mm(x1, m2) + b2[...])                       # (B, 32*L2)
    x3 = lrelu(mm(x2, m3) + b3[...])                       # (B, lat*L3)

    sn1 = lrelu(mm(x3, m4) + b4[...])                      # [s1 | n1]
    sn2 = lrelu(mm(sn1, a5) + mm(x2, c5) + b5[...])        # [s2 | n2]
    y = mm(sn2, a6) + mm(x1, c6) + b6[...]                 # [rec | noi]

    # sigmoid; reciprocal runs on the EUP (free slot) instead of a VALU div.
    out_ref[...] = pl.reciprocal(1.0 + jnp.exp(-y), approx=True)


@jax.jit
def forward(packed, x_ncl):
    """x_ncl: (B, C_in, L) as in PyTorch. Returns (reconstructed, noise)."""
    B = x_ncl.shape[0]
    # NCL flatten == channel-major flatten expected by the packed matrices.
    x_flat = x_ncl.reshape(B, -1).astype(jnp.float32)
    n2 = packed[-1].shape[-1]                              # bias6 is (1, 2*L_final)

    vmem_spec = pl.BlockSpec(memory_space=pltpu.MemorySpace.VMEM)
    y = pl.pallas_call(
        _unet_kernel,
        out_shape=jax.ShapeDtypeStruct((B, n2), jnp.float32),
        # Single invocation, no grid: all weights + activations total well
        # under 1 MiB, so everything is resident in VMEM on v5e/v6e/v7x.
        # TODO(synk): for realistic (large B) sizes, add a grid over the batch
        # dim with BlockSpec tiling, mark it "parallel" (v7x: 2 TensorCores),
        # and re-derive tile sizes against the 64 MiB v7x VMEM.
        in_specs=[vmem_spec] * (1 + len(packed)),
        out_specs=vmem_spec,
    )(x_flat, *packed)
    n = n2 // 2
    return y[:, :n], y[:, n:]                              # (reconstructed, noise)


# ---------------------------------------------------------------------------
# Parameters (deterministic, PyTorch-default-style uniform init)
# ---------------------------------------------------------------------------
def init_params(key, input_channels=1, latent_dim=16):
    params = {}

    def conv_p(k, c_out, c_in, ksz):
        k1, k2 = jax.random.split(k)
        bound = 1.0 / (c_in * ksz) ** 0.5
        w = jax.random.uniform(k1, (c_out, c_in, ksz), jnp.float32, -bound, bound)
        b = jax.random.uniform(k2, (c_out,), jnp.float32, -bound, bound)
        return w, b

    def convT_p(k, c_in, c_out, ksz):
        k1, k2 = jax.random.split(k)
        bound = 1.0 / (c_out * ksz) ** 0.5
        w = jax.random.uniform(k1, (c_in, c_out, ksz), jnp.float32, -bound, bound)
        b = jax.random.uniform(k2, (c_out,), jnp.float32, -bound, bound)
        return w, b

    keys = jax.random.split(key, 9)
    params["enc1"] = conv_p(keys[0], 16, input_channels, 3)
    params["enc2"] = conv_p(keys[1], 32, 16, 3)
    params["enc3"] = conv_p(keys[2], latent_dim, 32, 3)
    params["decSig1"] = convT_p(keys[3], latent_dim, 32, 3)
    params["decSig2"] = convT_p(keys[4], 64, 16, 3)
    params["decSig3"] = convT_p(keys[5], 32, 1, 3)
    params["decNoi1"] = convT_p(keys[6], latent_dim, 32, 3)
    params["decNoi2"] = convT_p(keys[7], 64, 16, 3)
    params["decNoi3"] = convT_p(keys[8], 32, 1, 3)
    return params


# ---------------------------------------------------------------------------
# Pure-JAX reference (matches Conv1DUnetBN.forward) for a sanity cross-check.
# ---------------------------------------------------------------------------
def _forward_ref(params, x):
    def lrelu(v):
        return jnp.where(v >= 0, v, NEG_SLOPE * v)

    def conv1d(h, w, b, stride, padding):
        y = lax.conv_general_dilated(
            h, w, window_strides=(stride,), padding=[(padding, padding)],
            dimension_numbers=("NCH", "OIH", "NCH"))
        return y + b[None, :, None]

    def convT1d(h, w, b, stride, padding, output_padding):
        K = w.shape[2]
        w_conv = jnp.flip(w, axis=2).transpose(1, 0, 2)   # (C_out, C_in, K)
        y = lax.conv_general_dilated(
            h, w_conv, window_strides=(1,),
            padding=[(K - 1 - padding, K - 1 - padding + output_padding)],
            lhs_dilation=(stride,),
            dimension_numbers=("NCH", "OIH", "NCH"))
        return y + b[None, :, None]

    def pad_L(a, n):
        return jnp.pad(a, ((0, 0), (0, 0), (0, n)))

    x1 = lrelu(conv1d(x, *params["enc1"], 2, 1))
    x2 = lrelu(conv1d(x1, *params["enc2"], 2, 1))
    x3 = lrelu(conv1d(x2, *params["enc3"], 2, 1))

    s1 = lrelu(convT1d(x3, *params["decSig1"], 2, 1, 1))
    s2 = lrelu(convT1d(jnp.concatenate(
        [s1, pad_L(x2, s1.shape[-1] - x2.shape[-1])], axis=1),
        *params["decSig2"], 2, 1, 1))
    rec = jax.nn.sigmoid(convT1d(jnp.concatenate(
        [s2, pad_L(x1, s2.shape[-1] - x1.shape[-1])], axis=1),
        *params["decSig3"], 2, 1, 1))

    n1 = lrelu(convT1d(x3, *params["decNoi1"], 2, 1, 1))
    n2 = lrelu(convT1d(jnp.concatenate(
        [n1, pad_L(x2, n1.shape[-1] - x2.shape[-1])], axis=1),
        *params["decNoi2"], 2, 1, 1))
    noi = jax.nn.sigmoid(convT1d(jnp.concatenate(
        [n2, pad_L(x1, n2.shape[-1] - x1.shape[-1])], axis=1),
        *params["decNoi3"], 2, 1, 1))
    return jnp.squeeze(rec, axis=1), jnp.squeeze(noi, axis=1)


if __name__ == "__main__":
    key = jax.random.PRNGKey(0)
    kp, kx = jax.random.split(key)
    params = init_params(kp, input_channels=1, latent_dim=16)

    # L=12 keeps the U-Net skip-connection lengths consistent with the
    # PyTorch model's hard-coded F.pad(...,(0,1)) / (0,2).
    B, C_in, L = 2, 1, 12
    x = jax.random.normal(kx, (B, C_in, L), jnp.float32)

    packed = pack_params(params, L=L)        # one-time host-side weight lowering
    reconstructed, noise = forward(packed, x)
    jax.block_until_ready((reconstructed, noise))
    assert reconstructed.shape == (B, 16) and noise.shape == (B, 16)

    # Cross-check against the pure-JAX reference (bf16 MXU operands in the
    # fused kernel -> loose tolerance).
    rec_ref, noi_ref = _forward_ref(params, x)
    assert float(jnp.max(jnp.abs(reconstructed - rec_ref))) < 5e-2
    assert float(jnp.max(jnp.abs(noise - noi_ref))) < 5e-2

    print("KERNEL_OK")
</pallas_src>

<mosaic_0001>
module attributes {stable_mosaic.version = 11 : i64} {
  func.func @_unet_kernel(%arg0: memref<2x12xf32, #tpu.memory_space<vmem>>, %arg1: memref<12x96xbf16, #tpu.memory_space<vmem>>, %arg2: memref<96x96xbf16, #tpu.memory_space<vmem>>, %arg3: memref<96x32xbf16, #tpu.memory_space<vmem>>, %arg4: memref<32x256xbf16, #tpu.memory_space<vmem>>, %arg5: memref<256x256xbf16, #tpu.memory_space<vmem>>, %arg6: memref<96x256xbf16, #tpu.memory_space<vmem>>, %arg7: memref<256x32xbf16, #tpu.memory_space<vmem>>, %arg8: memref<96x32xbf16, #tpu.memory_space<vmem>>, %arg9: memref<1x96xf32, #tpu.memory_space<vmem>>, %arg10: memref<1x96xf32, #tpu.memory_space<vmem>>, %arg11: memref<1x32xf32, #tpu.memory_space<vmem>>, %arg12: memref<1x256xf32, #tpu.memory_space<vmem>>, %arg13: memref<1x256xf32, #tpu.memory_space<vmem>>, %arg14: memref<1x32xf32, #tpu.memory_space<vmem>>, %arg15: memref<2x32xf32, #tpu.memory_space<vmem>>) attributes {dimension_semantics = [], scalar_prefetch = 0 : i64, scratch_operands = 0 : i64, tpu.core_type = #tpu.core_type<tc>} {
    %c0 = arith.constant 0 : index
    %c0_0 = arith.constant 0 : index
    %0 = vector.load %arg0[%c0, %c0_0] : memref<2x12xf32, #tpu.memory_space<vmem>>, vector<2x12xf32>
    %1 = arith.truncf %0 : vector<2x12xf32> to vector<2x12xbf16>
    %c0_1 = arith.constant 0 : index
    %c0_2 = arith.constant 0 : index
    %2 = vector.load %arg1[%c0_1, %c0_2] : memref<12x96xbf16, #tpu.memory_space<vmem>>, vector<12x96xbf16>
    %cst = arith.constant dense<0.000000e+00> : vector<2x96xf32>
    %3 = tpu.matmul %1, %2, %cst {dimension_numbers = #tpu.dot_dimension_numbers<[1], [0], [0], [1], [0, 0, 1, 1], [], []>} : vector<2x12xbf16>, vector<12x96xbf16>, vector<2x96xf32> -> vector<2x96xf32>
    %c0_3 = arith.constant 0 : index
    %c0_4 = arith.constant 0 : index
    %4 = vector.load %arg9[%c0_3, %c0_4] : memref<1x96xf32, #tpu.memory_space<vmem>>, vector<1x96xf32>
    %5 = vector.broadcast %4 : vector<1x96xf32> to vector<2x96xf32>
    %6 = arith.addf %3, %5 : vector<2x96xf32>
    %cst_5 = arith.constant 0.000000e+00 : f32
    %7 = vector.broadcast %cst_5 : f32 to vector<2x96xf32>
    %8 = arith.cmpf oge, %6, %7 : vector<2x96xf32>
    %cst_6 = arith.constant 0.00999999977 : f32
    %9 = vector.broadcast %cst_6 : f32 to vector<2x96xf32>
    %10 = arith.mulf %9, %6 : vector<2x96xf32>
    %11 = arith.select %8, %6, %10 : vector<2x96xi1>, vector<2x96xf32>
    %12 = arith.truncf %11 : vector<2x96xf32> to vector<2x96xbf16>
    %c0_7 = arith.constant 0 : index
    %c0_8 = arith.constant 0 : index
    %13 = vector.load %arg2[%c0_7, %c0_8] : memref<96x96xbf16, #tpu.memory_space<vmem>>, vector<96x96xbf16>
    %cst_9 = arith.constant dense<0.000000e+00> : vector<2x96xf32>
    %14 = tpu.matmul %12, %13, %cst_9 {dimension_numbers = #tpu.dot_dimension_numbers<[1], [0], [0], [1], [0, 0, 1, 1], [], []>} : vector<2x96xbf16>, vector<96x96xbf16>, vector<2x96xf32> -> vector<2x96xf32>
    %c0_10 = arith.constant 0 : index
    %c0_11 = arith.constant 0 : index
    %15 = vector.load %arg10[%c0_10, %c0_11] : memref<1x96xf32, #tpu.memory_space<vmem>>, vector<1x96xf32>
    %16 = vector.broadcast %15 : vector<1x96xf32> to vector<2x96xf32>
    %17 = arith.addf %14, %16 : vector<2x96xf32>
    %cst_12 = arith.constant 0.000000e+00 : f32
    %18 = vector.broadcast %cst_12 : f32 to vector<2x96xf32>
    %19 = arith.cmpf oge, %17, %18 : vector<2x96xf32>
    %cst_13 = arith.constant 0.00999999977 : f32
    %20 = vector.broadcast %cst_13 : f32 to vector<2x96xf32>
    %21 = arith.mulf %20, %17 : vector<2x96xf32>
    %22 = arith.select %19, %17, %21 : vector<2x96xi1>, vector<2x96xf32>
    %23 = arith.truncf %22 : vector<2x96xf32> to vector<2x96xbf16>
    %c0_14 = arith.constant 0 : index
    %c0_15 = arith.constant 0 : index
    %24 = vector.load %arg3[%c0_14, %c0_15] : memref<96x32xbf16, #tpu.memory_space<vmem>>, vector<96x32xbf16>
    %cst_16 = arith.constant dense<0.000000e+00> : vector<2x32xf32>
    %25 = tpu.matmul %23, %24, %cst_16 {dimension_numbers = #tpu.dot_dimension_numbers<[1], [0], [0], [1], [0, 0, 1, 1], [], []>} : vector<2x96xbf16>, vector<96x32xbf16>, vector<2x32xf32> -> vector<2x32xf32>
    %c0_17 = arith.constant 0 : index
    %c0_18 = arith.constant 0 : index
    %26 = vector.load %arg11[%c0_17, %c0_18] : memref<1x32xf32, #tpu.memory_space<vmem>>, vector<1x32xf32>
    %27 = vector.broadcast %26 : vector<1x32xf32> to vector<2x32xf32>
    %28 = arith.addf %25, %27 : vector<2x32xf32>
    %cst_19 = arith.constant 0.000000e+00 : f32
    %29 = vector.broadcast %cst_19 : f32 to vector<2x32xf32>
    %30 = arith.cmpf oge, %28, %29 : vector<2x32xf32>
    %cst_20 = arith.constant 0.00999999977 : f32
    %31 = vector.broadcast %cst_20 : f32 to vector<2x32xf32>
    %32 = arith.mulf %31, %28 : vector<2x32xf32>
    %33 = arith.select %30, %28, %32 : vector<2x32xi1>, vector<2x32xf32>
    %34 = arith.truncf %33 : vector<2x32xf32> to vector<2x32xbf16>
    %c0_21 = arith.constant 0 : index
    %c0_22 = arith.constant 0 : index
    %35 = vector.load %arg4[%c0_21, %c0_22] : memref<32x256xbf16, #tpu.memory_space<vmem>>, vector<32x256xbf16>
    %cst_23 = arith.constant dense<0.000000e+00> : vector<2x256xf32>
    %36 = tpu.matmul %34, %35, %cst_23 {dimension_numbers = #tpu.dot_dimension_numbers<[1], [0], [0], [1], [0, 0, 1, 1], [], []>} : vector<2x32xbf16>, vector<32x256xbf16>, vector<2x256xf32> -> vector<2x256xf32>
    %c0_24 = arith.constant 0 : index
    %c0_25 = arith.constant 0 : index
    %37 = vector.load %arg12[%c0_24, %c0_25] : memref<1x256xf32, #tpu.memory_space<vmem>>, vector<1x256xf32>
    %38 = vector.broadcast %37 : vector<1x256xf32> to vector<2x256xf32>
    %39 = arith.addf %36, %38 : vector<2x256xf32>
    %cst_26 = arith.constant 0.000000e+00 : f32
    %40 = vector.broadcast %cst_26 : f32 to vector<2x256xf32>
    %41 = arith.cmpf oge, %39, %40 : vector<2x256xf32>
    %cst_27 = arith.constant 0.00999999977 : f32
    %42 = vector.broadcast %cst_27 : f32 to vector<2x256xf32>
    %43 = arith.mulf %42, %39 : vector<2x256xf32>
    %44 = arith.select %41, %39, %43 : vector<2x256xi1>, vector<2x256xf32>
    %45 = arith.truncf %44 : vector<2x256xf32> to vector<2x256xbf16>
    %c0_28 = arith.constant 0 : index
    %c0_29 = arith.constant 0 : index
    %46 = vector.load %arg5[%c0_28, %c0_29] : memref<256x256xbf16, #tpu.memory_space<vmem>>, vector<256x256xbf16>
    %cst_30 = arith.constant dense<0.000000e+00> : vector<2x256xf32>
    %47 = tpu.matmul %45, %46, %cst_30 {dimension_numbers = #tpu.dot_dimension_numbers<[1], [0], [0], [1], [0, 0, 1, 1], [], []>} : vector<2x256xbf16>, vector<256x256xbf16>, vector<2x256xf32> -> vector<2x256xf32>
    %48 = arith.truncf %22 : vector<2x96xf32> to vector<2x96xbf16>
    %c0_31 = arith.constant 0 : index
    %c0_32 = arith.constant 0 : index
    %49 = vector.load %arg6[%c0_31, %c0_32] : memref<96x256xbf16, #tpu.memory_space<vmem>>, vector<96x256xbf16>
    %cst_33 = arith.constant dense<0.000000e+00> : vector<2x256xf32>
    %50 = tpu.matmul %48, %49, %cst_33 {dimension_numbers = #tpu.dot_dimension_numbers<[1], [0], [0], [1], [0, 0, 1, 1], [], []>} : vector<2x96xbf16>, vector<96x256xbf16>, vector<2x256xf32> -> vector<2x256xf32>
    %51 = arith.addf %47, %50 : vector<2x256xf32>
    %c0_34 = arith.constant 0 : index
    %c0_35 = arith.constant 0 : index
    %52 = vector.load %arg13[%c0_34, %c0_35] : memref<1x256xf32, #tpu.memory_space<vmem>>, vector<1x256xf32>
    %53 = vector.broadcast %52 : vector<1x256xf32> to vector<2x256xf32>
    %54 = arith.addf %51, %53 : vector<2x256xf32>
    %cst_36 = arith.constant 0.000000e+00 : f32
    %55 = vector.broadcast %cst_36 : f32 to vector<2x256xf32>
    %56 = arith.cmpf oge, %54, %55 : vector<2x256xf32>
    %cst_37 = arith.constant 0.00999999977 : f32
    %57 = vector.broadcast %cst_37 : f32 to vector<2x256xf32>
    %58 = arith.mulf %57, %54 : vector<2x256xf32>
    %59 = arith.select %56, %54, %58 : vector<2x256xi1>, vector<2x256xf32>
    %60 = arith.truncf %59 : vector<2x256xf32> to vector<2x256xbf16>
    %c0_38 = arith.constant 0 : index
    %c0_39 = arith.constant 0 : index
    %61 = vector.load %arg7[%c0_38, %c0_39] : memref<256x32xbf16, #tpu.memory_space<vmem>>, vector<256x32xbf16>
    %cst_40 = arith.constant dense<0.000000e+00> : vector<2x32xf32>
    %62 = tpu.matmul %60, %61, %cst_40 {dimension_numbers = #tpu.dot_dimension_numbers<[1], [0], [0], [1], [0, 0, 1, 1], [], []>} : vector<2x256xbf16>, vector<256x32xbf16>, vector<2x32xf32> -> vector<2x32xf32>
    %63 = arith.truncf %11 : vector<2x96xf32> to vector<2x96xbf16>
    %c0_41 = arith.constant 0 : index
    %c0_42 = arith.constant 0 : index
    %64 = vector.load %arg8[%c0_41, %c0_42] : memref<96x32xbf16, #tpu.memory_space<vmem>>, vector<96x32xbf16>
    %cst_43 = arith.constant dense<0.000000e+00> : vector<2x32xf32>
    %65 = tpu.matmul %63, %64, %cst_43 {dimension_numbers = #tpu.dot_dimension_numbers<[1], [0], [0], [1], [0, 0, 1, 1], [], []>} : vector<2x96xbf16>, vector<96x32xbf16>, vector<2x32xf32> -> vector<2x32xf32>
    %66 = arith.addf %62, %65 : vector<2x32xf32>
    %c0_44 = arith.constant 0 : index
    %c0_45 = arith.constant 0 : index
    %67 = vector.load %arg14[%c0_44, %c0_45] : memref<1x32xf32, #tpu.memory_space<vmem>>, vector<1x32xf32>
    %68 = vector.broadcast %67 : vector<1x32xf32> to vector<2x32xf32>
    %69 = arith.addf %66, %68 : vector<2x32xf32>
    %cst_46 = arith.constant 0.000000e+00 : f32
    %70 = vector.broadcast %cst_46 : f32 to vector<2x32xf32>
    %71 = arith.subf %70, %69 : vector<2x32xf32>
    %72 = math.exp %71 : vector<2x32xf32>
    %cst_47 = arith.constant 1.000000e+00 : f32
    %73 = vector.broadcast %cst_47 : f32 to vector<2x32xf32>
    %74 = arith.addf %73, %72 : vector<2x32xf32>
    %75 = tpu.reciprocal %74 {approx = true} : vector<2x32xf32> -> vector<2x32xf32>
    %c0_48 = arith.constant 0 : index
    %c0_49 = arith.constant 0 : index
    %76 = vector.load %arg15[%c0_48, %c0_49] : memref<2x32xf32, #tpu.memory_space<vmem>>, vector<2x32xf32>
    tpu.vector_store %arg15[%c0_48, %c0_49], %75 {strides = array<i32>} : memref<2x32xf32, #tpu.memory_space<vmem>>, vector<2x32xf32>,
    return
  }
}

</mosaic_0001>

<llo_original>
// kernel: forward.1
$region0: #{forward.1}
  #allocation0 [shape = 'u32[]', space=smem, size = 0x4, offset = 0x4, fixed_abs, tag = 'smem constant byte address 0x4 - core index']
  #allocation1 [shape = 'u32[144,128]{1,0:T(1,128)}', space=vmem, size = 0x12000, scoped, tag = 'internal scratch']
  %s0 = inlined_call_operand.vmem [shape: f32[2,12], index: 0, kind: input, shape index: {}]
  %s1 = inlined_call_operand.hbm [shape: bf16[12,96], index: 1, kind: input, shape index: {}]
  %s2 = inlined_call_operand.vmem [shape: bf16[96,96], index: 2, kind: input, shape index: {}]
  %s3 = inlined_call_operand.vmem [shape: bf16[96,32], index: 3, kind: input, shape index: {}]
  %s4 = inlined_call_operand.hbm [shape: bf16[32,256], index: 4, kind: input, shape index: {}]
  %s5 = inlined_call_operand.vmem [shape: bf16[256,256], index: 5, kind: input, shape index: {}]
  %s6 = inlined_call_operand.hbm [shape: bf16[96,256], index: 6, kind: input, shape index: {}]
  %s7 = inlined_call_operand.vmem [shape: bf16[256,32], index: 7, kind: input, shape index: {}]
  %s8 = inlined_call_operand.vmem [shape: bf16[96,32], index: 8, kind: input, shape index: {}]
  %s9 = inlined_call_operand.vmem [shape: f32[1,96], index: 9, kind: input, shape index: {}]
  %s10 = inlined_call_operand.vmem [shape: f32[1,96], index: 10, kind: input, shape index: {}]
  %s11 = inlined_call_operand.vmem [shape: f32[1,32], index: 11, kind: input, shape index: {}]
  %s12 = inlined_call_operand.vmem [shape: f32[1,256], index: 12, kind: input, shape index: {}]
  %s13 = inlined_call_operand.vmem [shape: f32[1,256], index: 13, kind: input, shape index: {}]
  %s14 = inlined_call_operand.vmem [shape: f32[1,32], index: 14, kind: input, shape index: {}]
  %s15 = inlined_call_operand.vmem [shape: f32[2,32], index: 15, kind: output, shape index: {}]
  %s16 = sld [smem:[#allocation0]]
  $region82: #{forward.1} parent=0
    _
  %s18 = ssub.s32 1, %s16
  %s19 = scalar_select 0, %s18, %s16
  $region1: #{forward.1} parent=0
    #allocation2 [shape = 'u8[4096]{0}', space=vmem, size = 0x1000, scoped, tag = 'input window, operand 1, single buffered']
    #allocation3 [shape = 's32[1]{0}', space=sflag, size = 0x4, scoped, tag = 'scoped memory for forward.1']
    #allocation4 [shape = 'u8[16384]{0}', space=vmem, size = 0x4000, scoped, tag = 'input window, operand 4, single buffered']
    #allocation5 [shape = 's32[1]{0}', space=sflag, size = 0x4, scoped, tag = 'scoped memory for forward.1']
    #allocation6 [shape = 'u8[49152]{0}', space=vmem, size = 0xc000, scoped, tag = 'input window, operand 6, single buffered']
    %20 = vsyncpa [#allocation3], 0
    %21 = vsyncpa [#allocation5], 0
    // Predicated region
    $region2: #{forward.1} parent=1 // pred_check
      _
    $region3: #{forward.1} parent=1 // pred_check_branch
      %23 = sbr.rel (0) target = $region5
    $region4: #{forward.1} parent=1 // pred_region
      _
    $region5: #{forward.1} parent=1 // pred_fallthru
      _
    // Predicated region
    $region6: #{forward.1} parent=1 // pred_check
      _
    $region7: #{forward.1} parent=1 // pred_check_branch
      %25 = sbr.rel (0) target = $region9
    $region8: #{forward.1} parent=1 // pred_region
      %s27 = ssub.s32 128, 128
      %28 = vsyncadd [#allocation3], %s27
      %s29 = sshll.u32 [#allocation2], 4
      %s30 = int_to_ptr.vmem [resolvable:$true] %s29
      %35 = dma.hbm_to_vmem [thread:$0]  %s1, 128, %s30, [#allocation3], 64, 64, 4
    $region9: #{forward.1} parent=1 // pred_fallthru
      _
    // Predicated region
    $region10: #{forward.1} parent=1 // pred_check
      _
    $region11: #{forward.1} parent=1 // pred_check_branch
      %37 = sbr.rel (0) target = $region13
    $region12: #{forward.1} parent=1 // pred_region
      _
    $region13: #{forward.1} parent=1 // pred_fallthru
      _
    // Predicated region
    $region14: #{forward.1} parent=1 // pred_check
      _
    $region15: #{forward.1} parent=1 // pred_check_branch
      %39 = sbr.rel (0) target = $region17
    $region16: #{forward.1} parent=1 // pred_region
      _
    $region17: #{forward.1} parent=1 // pred_fallthru
      _
    // Predicated region
    $region18: #{forward.1} parent=1 // pred_check
      _
    $region19: #{forward.1} parent=1 // pred_check_branch
      %41 = sbr.rel (0) target = $region21
    $region20: #{forward.1} parent=1 // pred_region
      %s43 = ssub.s32 512, 512
      %44 = vsyncadd [#allocation5], %s43
      %s45 = sshll.u32 [#allocation4], 4
      %s46 = int_to_ptr.vmem [resolvable:$true] %s45
      %51 = dma.hbm_to_vmem [thread:$0]  %s4, 512, %s46, [#allocation5], 128, 128, 8
    $region21: #{forward.1} parent=1 // pred_fallthru
      _
    // Predicated region
    $region22: #{forward.1} parent=1 // pred_check
      _
    $region23: #{forward.1} parent=1 // pred_check_branch
      %53 = sbr.rel (0) target = $region25
    $region24: #{forward.1} parent=1 // pred_region
      _
    $region25: #{forward.1} parent=1 // pred_fallthru
      _
    // Predicated region
    $region26: #{forward.1} parent=1 // pred_check
      _
    $region27: #{forward.1} parent=1 // pred_check_branch
      %55 = sbr.rel (0) target = $region29
    $region28: #{forward.1} parent=1 // pred_region
      %s57 = ssub.s32 1536, 1536
      %58 = vsyncadd [#allocation5], %s57
      %s59 = sshll.u32 [#allocation6], 4
      %s60 = int_to_ptr.vmem [resolvable:$true] %s59
      %65 = dma.hbm_to_vmem [thread:$0]  %s6, 1536, %s60, [#allocation5], 128, 128, 8
    $region29: #{forward.1} parent=1 // pred_fallthru
      _
    // Predicated region
    $region30: #{forward.1} parent=1 // pred_check
      _
    $region31: #{forward.1} parent=1 // pred_check_branch
      %67 = sbr.rel (0) target = $region33
    $region32: #{forward.1} parent=1 // pred_region
      _
    $region33: #{forward.1} parent=1 // pred_fallthru
      _
    // Predicated region
    $region34: #{forward.1} parent=1 // pred_check
      _
    $region35: #{forward.1} parent=1 // pred_check_branch
      %69 = sbr.rel (0) target = $region37
    $region36: #{forward.1} parent=1 // pred_region
      _
    $region37: #{forward.1} parent=1 // pred_fallthru
      _
    // Predicated region
    $region38: #{forward.1} parent=1 // pred_check
      _
    $region39: #{forward.1} parent=1 // pred_check_branch
      %71 = sbr.rel (0) target = $region41
    $region40: #{forward.1} parent=1 // pred_region
      _
    $region41: #{forward.1} parent=1 // pred_fallthru
      _
    // Predicated region
    $region42: #{forward.1} parent=1 // pred_check
      _
    $region43: #{forward.1} parent=1 // pred_check_branch
      %73 = sbr.rel (0) target = $region45
    $region44: #{forward.1} parent=1 // pred_region
      _
    $region45: #{forward.1} parent=1 // pred_fallthru
      _
    // Predicated region
    $region46: #{forward.1} parent=1 // pred_check
      _
    $region47: #{forward.1} parent=1 // pred_check_branch
      %75 = sbr.rel (0) target = $region49
    $region48: #{forward.1} parent=1 // pred_region
      _
    $region49: #{forward.1} parent=1 // pred_fallthru
      _
    // Predicated region
    $region50: #{forward.1} parent=1 // pred_check
      _
    $region51: #{forward.1} parent=1 // pred_check_branch
      %77 = sbr.rel (0) target = $region53
    $region52: #{forward.1} parent=1 // pred_region
      _
    $region53: #{forward.1} parent=1 // pred_fallthru
      _
    // Predicated region
    $region54: #{forward.1} parent=1 // pred_check
      _
    $region55: #{forward.1} parent=1 // pred_check_branch
      %79 = sbr.rel (0) target = $region57
    $region56: #{forward.1} parent=1 // pred_region
      _
    $region57: #{forward.1} parent=1 // pred_fallthru
      _
    // Predicated region
    $region58: #{forward.1} parent=1 // pred_check
      _
    $region59: #{forward.1} parent=1 // pred_check_branch
      %81 = sbr.rel (0) target = $region61
    $region60: #{forward.1} parent=1 // pred_region
      _
    $region61: #{forward.1} parent=1 // pred_fallthru
      _
    // Predicated region
    $region62: #{forward.1} parent=1 // pred_check
      _
    $region63: #{forward.1} parent=1 // pred_check_branch
      %83 = sbr.rel (0) target = $region65
    $region64: #{forward.1} parent=1 // pred_region
      %84 = dma.done [#allocation3], 128
    $region65: #{forward.1} parent=1 // pred_fallthru
      _
    // Predicated region
    $region66: #{forward.1} parent=1 // pred_check
      _
    $region67: #{forward.1} parent=1 // pred_check_branch
      %86 = sbr.rel (0) target = $region69
    $region68: #{forward.1} parent=1 // pred_region
      %87 = dma.done [#allocation5], 512
    $region69: #{forward.1} parent=1 // pred_fallthru
      _
    // Predicated region
    $region70: #{forward.1} parent=1 // pred_check
      _
    $region71: #{forward.1} parent=1 // pred_check_branch
      %89 = sbr.rel (0) target = $region73
    $region72: #{forward.1} parent=1 // pred_region
      %90 = dma.done [#allocation5], 1536
    $region73: #{forward.1} parent=1 // pred_fallthru
      _
    %v92 = vld [vmem:[%s0] sm:$0x3]
    %v93 = vpack.c.bf16 %v92, %v92
    %v94 = vld [vmem:[#allocation2] sm:$0xf]
    %v95 = vld [vmem:[#allocation2 + $0x4] sm:$0x3]
    %v96 = vld [vmem:[%s9] sm:$0x1]
    %v98 = vlaneseq
    %v99 = vshrl.u32 %v98, 7
    %v100 = vsub.s32 0, %v99
    %v101 = vrot.slane %v96, %v100
    %v105 = vunpack.c.l.b16 %v94
    %v106 = vunpack.c.l.b16 %v95
    %v107 = vpack.c.b16 %v106, %v105
    %vm108 = vcmask 97280
    %v110 = vsel %vm108, %v93, 0
    %vm112 = vcmask 1045504
    %v114 = vsel %vm112, %v107, 0
    %116 = vmatprep.subr.bf16.mxu0 0
    %117 = vmatpush1.bf16.msra.mxu0 %v114
    %118 = vmatprep.subr.bf16.mxu0 0
    %119 = vmatpush1.bf16.msra.mxu0 0
    %120 = vmatprep.subr.bf16.mxu0 0
    %121 = vmatpush1.bf16.msra.mxu0 0
    %122 = vmatprep.subr.bf16.mxu0 0
    %123 = vmatpush1.bf16.msra.mxu0 0
    %124 = vmatprep.subr.bf16.mxu0 0
    %125 = vmatpush1.bf16.msra.mxu0 0
    %126 = vmatprep.subr.bf16.mxu0 0
    %127 = vmatpush1.bf16.msra.mxu0 0
    %128 = vmatprep.subr.bf16.mxu0 0
    %129 = vmatpush1.bf16.msra.mxu0 0
    %130 = vmatprep.subr.bf16.mxu0 0
    %131 = vmatpush1.bf16.msra.mxu0 0
    %132 = vmatprep.subr.bf16.mxu0 0
    %133 = vmatpush1.bf16.msra.mxu0 0
    %134 = vmatprep.subr.bf16.mxu0 0
    %135 = vmatpush1.bf16.msra.mxu0 0
    %136 = vmatprep.subr.bf16.mxu0 0
    %137 = vmatpush1.bf16.msra.mxu0 0
    %138 = vmatprep.subr.bf16.mxu0 0
    %139 = vmatpush1.bf16.msra.mxu0 0
    %140 = vmatprep.subr.bf16.mxu0 0
    %141 = vmatpush1.bf16.msra.mxu0 0
    %142 = vmatprep.subr.bf16.mxu0 0
    %143 = vmatpush1.bf16.msra.mxu0 0
    %144 = vmatprep.subr.bf16.mxu0 0
    %145 = vmatpush1.bf16.msra.mxu0 0
    %146 = vmatprep.subr.bf16.mxu0 0
    %147 = vmatpush1.bf16.msra.mxu0 0
    %148 = vmatprep.mubr.bf16.mxu0 0
    %149 = vmatmul.mubr.bf16.gmra.mrb[0].mxu0 %v110
    %v150 = vpop.f32.mrb[0].mxu0
    %v151 = vadd.f32 %v101, %v150
    %v152 = vpop.f32.mrb[0].mxu0
    %v153 = vpop.f32.mrb[0].mxu0
    %v154 = vpop.f32.mrb[0].mxu0
    %155 = vdwg.mxu0
    %vm156 = vcmp.ge.f32.partialorder %v151, 0.0
    %v157 = vmul.f32 %v151, 0.01
    %v158 = vsel %vm156, %v151, %v157
    %v159 = vpack.c.bf16 %v158, %v158
    %v160 = vld [vmem:[%s2] sm:$0xf]
    %v161 = vld [vmem:[%s2 + $0x4] sm:$0xf]
    %v162 = vld [vmem:[%s2 + $0x8] sm:$0xf]
    %v163 = vld [vmem:[%s2 + $0xc] sm:$0xf]
    %v164 = vld [vmem:[%s2 + $0x10] sm:$0xf]
    %v165 = vld [vmem:[%s2 + $0x14] sm:$0xf]
    %v166 = vld [vmem:[%s2 + $0x18] sm:$0xf]
    %v167 = vld [vmem:[%s2 + $0x1c] sm:$0xf]
    %v168 = vld [vmem:[%s2 + $0x20] sm:$0xf]
    %v169 = vld [vmem:[%s2 + $0x24] sm:$0xf]
    %v170 = vld [vmem:[%s2 + $0x28] sm:$0xf]
    %v171 = vld [vmem:[%s2 + $0x2c] sm:$0xf]
    %v172 = vld [vmem:[%s10] sm:$0x1]
    %v174 = vlaneseq
    %v175 = vshrl.u32 %v174, 7
    %v176 = vsub.s32 0, %v175
    %v177 = vrot.slane %v172, %v176
    %v191 = vunpack.c.l.b16 %v160
    %v192 = vunpack.c.l.b16 %v161
    %v193 = vunpack.c.l.b16 %v162
    %v194 = vunpack.c.l.b16 %v163
    %v195 = vunpack.c.l.b16 %v164
    %v196 = vunpack.c.l.b16 %v165
    %v197 = vunpack.c.l.b16 %v166
    %v198 = vunpack.c.l.b16 %v167
    %v199 = vunpack.c.l.b16 %v168
    %v200 = vunpack.c.l.b16 %v169
    %v201 = vunpack.c.l.b16 %v170
    %v202 = vunpack.c.l.b16 %v171
    %v203 = vpack.c.b16 %v192, %v191
    %v204 = vpack.c.b16 %v194, %v193
    %v205 = vpack.c.b16 %v196, %v195
    %v206 = vpack.c.b16 %v198, %v197
    %v207 = vpack.c.b16 %v200, %v199
    %v208 = vpack.c.b16 %v202, %v201
    %vm215 = vcmask 785408
    %v217 = vsel %vm215, %v159, 0
    %219 = vmatprep.subr.bf16.mxu0 0
    %220 = vmatpush1.bf16.msra.mxu0 %v203
    %221 = vmatprep.subr.bf16.mxu0 0
    %222 = vmatpush1.bf16.msra.mxu0 %v204
    %223 = vmatprep.subr.bf16.mxu0 0
    %224 = vmatpush1.bf16.msra.mxu0 %v205
    %225 = vmatprep.subr.bf16.mxu0 0
    %226 = vmatpush1.bf16.msra.mxu0 %v206
    %227 = vmatprep.subr.bf16.mxu0 0
    %228 = vmatpush1.bf16.msra.mxu0 %v207
    %229 = vmatprep.subr.bf16.mxu0 0
    %230 = vmatpush1.bf16.msra.mxu0 %v208
    %231 = vmatprep.subr.bf16.mxu0 0
    %232 = vmatpush1.bf16.msra.mxu0 0
    %233 = vmatprep.subr.bf16.mxu0 0
    %234 = vmatpush1.bf16.msra.mxu0 0
    %235 = vmatprep.subr.bf16.mxu0 0
    %236 = vmatpush1.bf16.msra.mxu0 0
    %237 = vmatprep.subr.bf16.mxu0 0
    %238 = vmatpush1.bf16.msra.mxu0 0
    %239 = vmatprep.subr.bf16.mxu0 0
    %240 = vmatpush1.bf16.msra.mxu0 0
    %241 = vmatprep.subr.bf16.mxu0 0
    %242 = vmatpush1.bf16.msra.mxu0 0
    %243 = vmatprep.subr.bf16.mxu0 0
    %244 = vmatpush1.bf16.msra.mxu0 0
    %245 = vmatprep.subr.bf16.mxu0 0
    %246 = vmatpush1.bf16.msra.mxu0 0
    %247 = vmatprep.subr.bf16.mxu0 0
    %248 = vmatpush1.bf16.msra.mxu0 0
    %249 = vmatprep.subr.bf16.mxu0 0
    %250 = vmatpush1.bf16.msra.mxu0 0
    %251 = vmatprep.mubr.bf16.mxu0 0
    %252 = vmatmul.mubr.bf16.gmra.mrb[0].mxu0 %v217
    %v253 = vpop.f32.mrb[0].mxu0
    %v254 = vadd.f32 %v177, %v253
    %v255 = vpop.f32.mrb[0].mxu0
    %v256 = vpop.f32.mrb[0].mxu0
    %v257 = vpop.f32.mrb[0].mxu0
    %258 = vdwg.mxu0
    %vm259 = vcmp.ge.f32.partialorder %v254, 0.0
    %v260 = vmul.f32 %v254, 0.01
    %v261 = vsel %vm259, %v254, %v260
    %v262 = vpack.c.bf16 %v261, %v261
    %v263 = vld [vmem:[%s3] sm:$0xf]
    %v264 = vld [vmem:[%s3 + $0x4] sm:$0xf]
    %v265 = vld [vmem:[%s3 + $0x8] sm:$0xf]
    %v266 = vld [vmem:[%s3 + $0xc] sm:$0xf]
    %v267 = vld [vmem:[%s3 + $0x10] sm:$0xf]
    %v268 = vld [vmem:[%s3 + $0x14] sm:$0xf]
    %v269 = vld [vmem:[%s3 + $0x18] sm:$0xf]
    %v270 = vld [vmem:[%s3 + $0x1c] sm:$0xf]
    %v271 = vld [vmem:[%s3 + $0x20] sm:$0xf]
    %v272 = vld [vmem:[%s3 + $0x24] sm:$0xf]
    %v273 = vld [vmem:[%s3 + $0x28] sm:$0xf]
    %v274 = vld [vmem:[%s3 + $0x2c] sm:$0xf]
    %v275 = vld [vmem:[%s11] sm:$0x1]
    %v277 = vlaneseq
    %v278 = vshrl.u32 %v277, 7
    %v279 = vsub.s32 0, %v278
    %v280 = vrot.slane %v275, %v279
    %v294 = vunpack.c.l.b16 %v263
    %v295 = vunpack.c.l.b16 %v264
    %v296 = vunpack.c.l.b16 %v265
    %v297 = vunpack.c.l.b16 %v266
    %v298 = vunpack.c.l.b16 %v267
    %v299 = vunpack.c.l.b16 %v268
    %v300 = vunpack.c.l.b16 %v269
    %v301 = vunpack.c.l.b16 %v270
    %v302 = vunpack.c.l.b16 %v271
    %v303 = vunpack.c.l.b16 %v272
    %v304 = vunpack.c.l.b16 %v273
    %v305 = vunpack.c.l.b16 %v274
    %v306 = vpack.c.b16 %v295, %v294
    %v307 = vpack.c.b16 %v297, %v296
    %v308 = vpack.c.b16 %v299, %v298
    %v309 = vpack.c.b16 %v301, %v300
    %v310 = vpack.c.b16 %v303, %v302
    %v311 = vpack.c.b16 %v305, %v304
    %v319 = vsel %vm215, %v262, 0
    %321 = vmatprep.subr.bf16.mxu0 0
    %322 = vmatpush1.bf16.msra.mxu0 %v306
    %323 = vmatprep.subr.bf16.mxu0 0
    %324 = vmatpush1.bf16.msra.mxu0 %v307
    %325 = vmatprep.subr.bf16.mxu0 0
    %326 = vmatpush1.bf16.msra.mxu0 %v308
    %327 = vmatprep.subr.bf16.mxu0 0
    %328 = vmatpush1.bf16.msra.mxu0 %v309
    %329 = vmatprep.subr.bf16.mxu0 0
    %330 = vmatpush1.bf16.msra.mxu0 %v310
    %331 = vmatprep.subr.bf16.mxu0 0
    %332 = vmatpush1.bf16.msra.mxu0 %v311
    %333 = vmatprep.subr.bf16.mxu0 0
    %334 = vmatpush1.bf16.msra.mxu0 0
    %335 = vmatprep.subr.bf16.mxu0 0
    %336 = vmatpush1.bf16.msra.mxu0 0
    %337 = vmatprep.subr.bf16.mxu0 0
    %338 = vmatpush1.bf16.msra.mxu0 0
    %339 = vmatprep.subr.bf16.mxu0 0
    %340 = vmatpush1.bf16.msra.mxu0 0
    %341 = vmatprep.subr.bf16.mxu0 0
    %342 = vmatpush1.bf16.msra.mxu0 0
    %343 = vmatprep.subr.bf16.mxu0 0
    %344 = vmatpush1.bf16.msra.mxu0 0
    %345 = vmatprep.subr.bf16.mxu0 0
    %346 = vmatpush1.bf16.msra.mxu0 0
    %347 = vmatprep.subr.bf16.mxu0 0
    %348 = vmatpush1.bf16.msra.mxu0 0
    %349 = vmatprep.subr.bf16.mxu0 0
    %350 = vmatpush1.bf16.msra.mxu0 0
    %351 = vmatprep.subr.bf16.mxu0 0
    %352 = vmatpush1.bf16.msra.mxu0 0
    %353 = vmatprep.mubr.bf16.mxu0 0
    %354 = vmatmul.mubr.bf16.gmra.mrb[0].mxu0 %v319
    %v355 = vpop.f32.mrb[0].mxu0
    %v356 = vadd.f32 %v280, %v355
    %v357 = vpop.f32.mrb[0].mxu0
    %v358 = vpop.f32.mrb[0].mxu0
    %v359 = vpop.f32.mrb[0].mxu0
    %360 = vdwg.mxu0
    %vm361 = vcmp.ge.f32.partialorder %v356, 0.0
    %v362 = vmul.f32 %v356, 0.01
    %v363 = vsel %vm361, %v356, %v362
    %v364 = vpack.c.bf16 %v363, %v363
    %v365 = vld [vmem:[#allocation4] sm:$0xff]
    %v366 = vld [vmem:[#allocation4 + $0x8] sm:$0xff]
    %v367 = vld [vmem:[#allocation4 + $0x10] sm:$0xff]
    %v368 = vld [vmem:[#allocation4 + $0x18] sm:$0xff]
    %v369 = vld [vmem:[%s12] sm:$0x3]
    %v371 = vlaneseq
    %v372 = vshrl.u32 %v371, 7
    %v373 = vsub.s32 0, %v372
    %v374 = vrot.slane %v369, %v373
    %v375 = vlaneseq
    %v376 = vshrl.u32 %v375, 7
    %v377 = vsub.s32 1, %v376
    %v378 = vrot.slane %v369, %v377
    %v385 = vunpack.c.l.b16 %v365
    %v386 = vunpack.c.h.b16 %v365
    %v387 = vunpack.c.l.b16 %v366
    %v388 = vunpack.c.h.b16 %v366
    %v389 = vunpack.c.l.b16 %v367
    %v390 = vunpack.c.h.b16 %v367
    %v391 = vunpack.c.l.b16 %v368
    %v392 = vunpack.c.h.b16 %v368
    %v393 = vpack.c.b16 %v387, %v385
    %v394 = vpack.c.b16 %v388, %v386
    %v395 = vpack.c.b16 %v391, %v389
    %v396 = vpack.c.b16 %v392, %v390
    %vm401 = vcmask 261120
    %v403 = vsel %vm401, %v364, 0
    %405 = vmatprep.subr.bf16.mxu0 %v394
    %406 = vmatpush1.bf16.msra.mxu0 %v393
    %407 = vmatprep.subr.bf16.mxu0 %v396
    %408 = vmatpush1.bf16.msra.mxu0 %v395
    %409 = vmatprep.subr.bf16.mxu0 0
    %410 = vmatpush1.bf16.msra.mxu0 0
    %411 = vmatprep.subr.bf16.mxu0 0
    %412 = vmatpush1.bf16.msra.mxu0 0
    %413 = vmatprep.subr.bf16.mxu0 0
    %414 = vmatpush1.bf16.msra.mxu0 0
    %415 = vmatprep.subr.bf16.mxu0 0
    %416 = vmatpush1.bf16.msra.mxu0 0
    %417 = vmatprep.subr.bf16.mxu0 0
    %418 = vmatpush1.bf16.msra.mxu0 0
    %419 = vmatprep.subr.bf16.mxu0 0
    %420 = vmatpush1.bf16.msra.mxu0 0
    %421 = vmatprep.subr.bf16.mxu0 0
    %422 = vmatpush1.bf16.msra.mxu0 0
    %423 = vmatprep.subr.bf16.mxu0 0
    %424 = vmatpush1.bf16.msra.mxu0 0
    %425 = vmatprep.subr.bf16.mxu0 0
    %426 = vmatpush1.bf16.msra.mxu0 0
    %427 = vmatprep.subr.bf16.mxu0 0
    %428 = vmatpush1.bf16.msra.mxu0 0
    %429 = vmatprep.subr.bf16.mxu0 0
    %430 = vmatpush1.bf16.msra.mxu0 0
    %431 = vmatprep.subr.bf16.mxu0 0
    %432 = vmatpush1.bf16.msra.mxu0 0
    %433 = vmatprep.subr.bf16.mxu0 0
    %434 = vmatpush1.bf16.msra.mxu0 0
    %435 = vmatprep.subr.bf16.mxu0 0
    %436 = vmatpush1.bf16.msra.mxu0 0
    %437 = vmatprep.mubr.bf16.mxu0 0
    %438 = vmatmul.mubr.bf16.gmra.mrb[0].mxu0 %v403
    %v439 = vpop.f32.mrb[0].mxu0
    %v440 = vadd.f32 %v374, %v439
    %v441 = vpop.f32.mrb[0].mxu0
    %v442 = vadd.f32 %v378, %v441
    %v443 = vpop.f32.mrb[0].mxu0
    %v444 = vpop.f32.mrb[0].mxu0
    %445 = vdwg.mxu0
    %vm446 = vcmp.ge.f32.partialorder %v440, 0.0
    %vm447 = vcmp.ge.f32.partialorder %v442, 0.0
    %v448 = vmul.f32 %v440, 0.01
    %v449 = vmul.f32 %v442, 0.01
    %v450 = vsel %vm446, %v440, %v448
    %v451 = vsel %vm447, %v442, %v449
    %v452 = vpack.c.bf16 %v450, %v450
    %v453 = vpack.c.bf16 %v451, %v451
    %v454 = vld [vmem:[%s5] sm:$0xff]
    %v455 = vld [vmem:[%s5 + $0x8] sm:$0xff]
    %v456 = vld [vmem:[%s5 + $0x10] sm:$0xff]
    %v457 = vld [vmem:[%s5 + $0x18] sm:$0xff]
    %v458 = vld [vmem:[%s5 + $0x20] sm:$0xff]
    %v459 = vld [vmem:[%s5 + $0x28] sm:$0xff]
    %v460 = vld [vmem:[%s5 + $0x30] sm:$0xff]
    %v461 = vld [vmem:[%s5 + $0x38] sm:$0xff]
    %v462 = vld [vmem:[%s5 + $0x40] sm:$0xff]
    %v463 = vld [vmem:[%s5 + $0x48] sm:$0xff]
    %v464 = vld [vmem:[%s5 + $0x50] sm:$0xff]
    %v465 = vld [vmem:[%s5 + $0x58] sm:$0xff]
    %v466 = vld [vmem:[%s5 + $0x60] sm:$0xff]
    %v467 = vld [vmem:[%s5 + $0x68] sm:$0xff]
    %v468 = vld [vmem:[%s5 + $0x70] sm:$0xff]
    %v469 = vld [vmem:[%s5 + $0x78] sm:$0xff]
    %v470 = vld [vmem:[%s5 + $0x80] sm:$0xff]
    %v471 = vld [vmem:[%s5 + $0x88] sm:$0xff]
    %v472 = vld [vmem:[%s5 + $0x90] sm:$0xff]
    %v473 = vld [vmem:[%s5 + $0x98] sm:$0xff]
    %v474 = vld [vmem:[%s5 + $0xa0] sm:$0xff]
    %v475 = vld [vmem:[%s5 + $0xa8] sm:$0xff]
    %v476 = vld [vmem:[%s5 + $0xb0] sm:$0xff]
    %v477 = vld [vmem:[%s5 + $0xb8] sm:$0xff]
    %v478 = vld [vmem:[%s5 + $0xc0] sm:$0xff]
    %v479 = vld [vmem:[%s5 + $0xc8] sm:$0xff]
    %v480 = vld [vmem:[%s5 + $0xd0] sm:$0xff]
    %v481 = vld [vmem:[%s5 + $0xd8] sm:$0xff]
    %v482 = vld [vmem:[%s5 + $0xe0] sm:$0xff]
    %v483 = vld [vmem:[%s5 + $0xe8] sm:$0xff]
    %v484 = vld [vmem:[%s5 + $0xf0] sm:$0xff]
    %v485 = vld [vmem:[%s5 + $0xf8] sm:$0xff]
    %v486 = vld [vmem:[#allocation6] sm:$0xff]
    %v487 = vld [vmem:[#allocation6 + $0x8] sm:$0xff]
    %v488 = vld [vmem:[#allocation6 + $0x10] sm:$0xff]
    %v489 = vld [vmem:[#allocation6 + $0x18] sm:$0xff]
    %v490 = vld [vmem:[#allocation6 + $0x20] sm:$0xff]
    %v491 = vld [vmem:[#allocation6 + $0x28] sm:$0xff]
    %v492 = vld [vmem:[#allocation6 + $0x30] sm:$0xff]
    %v493 = vld [vmem:[#allocation6 + $0x38] sm:$0xff]
    %v494 = vld [vmem:[#allocation6 + $0x40] sm:$0xff]
    %v495 = vld [vmem:[#allocation6 + $0x48] sm:$0xff]
    %v496 = vld [vmem:[#allocation6 + $0x50] sm:$0xff]
    %v497 = vld [vmem:[#allocation6 + $0x58] sm:$0xff]
    %v510 = vunpack.c.l.b16 %v486
    %v511 = vunpack.c.h.b16 %v486
    %v512 = vunpack.c.l.b16 %v487
    %v513 = vunpack.c.h.b16 %v487
    %v514 = vunpack.c.l.b16 %v488
    %v515 = vunpack.c.h.b16 %v488
    %v516 = vunpack.c.l.b16 %v489
    %v517 = vunpack.c.h.b16 %v489
    %v518 = vunpack.c.l.b16 %v490
    %v519 = vunpack.c.h.b16 %v490
    %v520 = vunpack.c.l.b16 %v491
    %v521 = vunpack.c.h.b16 %v491
    %v522 = vunpack.c.l.b16 %v492
    %v523 = vunpack.c.h.b16 %v492
    %v524 = vunpack.c.l.b16 %v493
    %v525 = vunpack.c.h.b16 %v493
    %v526 = vunpack.c.l.b16 %v494
    %v527 = vunpack.c.h.b16 %v494
    %v528 = vunpack.c.l.b16 %v495
    %v529 = vunpack.c.h.b16 %v495
    %v530 = vunpack.c.l.b16 %v496
    %v531 = vunpack.c.h.b16 %v496
    %v532 = vunpack.c.l.b16 %v497
    %v533 = vunpack.c.h.b16 %v497
    %v534 = vpack.c.b16 %v512, %v510
    %v535 = vpack.c.b16 %v513, %v511
    %v536 = vpack.c.b16 %v516, %v514
    %v537 = vpack.c.b16 %v517, %v515
    %v538 = vpack.c.b16 %v520, %v518
    %v539 = vpack.c.b16 %v521, %v519
    %v540 = vpack.c.b16 %v524, %v522
    %v541 = vpack.c.b16 %v525, %v523
    %v542 = vpack.c.b16 %v528, %v526
    %v543 = vpack.c.b16 %v529, %v527
    %v544 = vpack.c.b16 %v532, %v530
    %v545 = vpack.c.b16 %v533, %v531
    %558 = vmatprep.subr.bf16.mxu0 %v535
    %559 = vmatpush1.bf16.msra.mxu0 %v534
    %560 = vmatprep.subr.bf16.mxu0 %v537
    %561 = vmatpush1.bf16.msra.mxu0 %v536
    %562 = vmatprep.subr.bf16.mxu0 %v539
    %563 = vmatpush1.bf16.msra.mxu0 %v538
    %564 = vmatprep.subr.bf16.mxu0 %v541
    %565 = vmatpush1.bf16.msra.mxu0 %v540
    %566 = vmatprep.subr.bf16.mxu0 %v543
    %567 = vmatpush1.bf16.msra.mxu0 %v542
    %568 = vmatprep.subr.bf16.mxu0 %v545
    %569 = vmatpush1.bf16.msra.mxu0 %v544
    %570 = vmatprep.subr.bf16.mxu0 0
    %571 = vmatpush1.bf16.msra.mxu0 0
    %572 = vmatprep.subr.bf16.mxu0 0
    %573 = vmatpush1.bf16.msra.mxu0 0
    %574 = vmatprep.subr.bf16.mxu0 0
    %575 = vmatpush1.bf16.msra.mxu0 0
    %576 = vmatprep.subr.bf16.mxu0 0
    %577 = vmatpush1.bf16.msra.mxu0 0
    %578 = vmatprep.subr.bf16.mxu0 0
    %579 = vmatpush1.bf16.msra.mxu0 0
    %580 = vmatprep.subr.bf16.mxu0 0
    %581 = vmatpush1.bf16.msra.mxu0 0
    %582 = vmatprep.subr.bf16.mxu0 0
    %583 = vmatpush1.bf16.msra.mxu0 0
    %584 = vmatprep.subr.bf16.mxu0 0
    %585 = vmatpush1.bf16.msra.mxu0 0
    %586 = vmatprep.subr.bf16.mxu0 0
    %587 = vmatpush1.bf16.msra.mxu0 0
    %588 = vmatprep.subr.bf16.mxu0 0
    %589 = vmatpush1.bf16.msra.mxu0 0
    %590 = vmatprep.mubr.bf16.mxu0 0
    %591 = vmatmul.mubr.bf16.gmra.mrb[0].mxu0 %v319
    %v592 = vpop.f32.mrb[0].mxu0
    %v593 = vadd.f32 0.0, %v592
    %v594 = vpop.f32.mrb[0].mxu0
    %v595 = vadd.f32 0.0, %v594
    %v596 = vpop.f32.mrb[0].mxu0
    %v597 = vpop.f32.mrb[0].mxu0
    %598 = vdwg.mxu0
    %v631 = vunpack.c.l.b16 %v454
    %v632 = vunpack.c.h.b16 %v454
    %v633 = vunpack.c.l.b16 %v455
    %v634 = vunpack.c.h.b16 %v455
    %v635 = vunpack.c.l.b16 %v456
    %v636 = vunpack.c.h.b16 %v456
    %v637 = vunpack.c.l.b16 %v457
    %v638 = vunpack.c.h.b16 %v457
    %v639 = vunpack.c.l.b16 %v458
    %v640 = vunpack.c.h.b16 %v458
    %v641 = vunpack.c.l.b16 %v459
    %v642 = vunpack.c.h.b16 %v459
    %v643 = vunpack.c.l.b16 %v460
    %v644 = vunpack.c.h.b16 %v460
    %v645 = vunpack.c.l.b16 %v461
    %v646 = vunpack.c.h.b16 %v461
    %v647 = vunpack.c.l.b16 %v462
    %v648 = vunpack.c.h.b16 %v462
    %v649 = vunpack.c.l.b16 %v463
    %v650 = vunpack.c.h.b16 %v463
    %v651 = vunpack.c.l.b16 %v464
    %v652 = vunpack.c.h.b16 %v464
    %v653 = vunpack.c.l.b16 %v465
    %v654 = vunpack.c.h.b16 %v465
    %v655 = vunpack.c.l.b16 %v466
    %v656 = vunpack.c.h.b16 %v466
    %v657 = vunpack.c.l.b16 %v467
    %v658 = vunpack.c.h.b16 %v467
    %v659 = vunpack.c.l.b16 %v468
    %v660 = vunpack.c.h.b16 %v468
    %v661 = vunpack.c.l.b16 %v469
    %v662 = vunpack.c.h.b16 %v469
    %v663 = vunpack.c.l.b16 %v470
    %v664 = vunpack.c.h.b16 %v470
    %v665 = vunpack.c.l.b16 %v471
    %v666 = vunpack.c.h.b16 %v471
    %v667 = vunpack.c.l.b16 %v472
    %v668 = vunpack.c.h.b16 %v472
    %v669 = vunpack.c.l.b16 %v473
    %v670 = vunpack.c.h.b16 %v473
    %v671 = vunpack.c.l.b16 %v474
    %v672 = vunpack.c.h.b16 %v474
    %v673 = vunpack.c.l.b16 %v475
    %v674 = vunpack.c.h.b16 %v475
    %v675 = vunpack.c.l.b16 %v476
    %v676 = vunpack.c.h.b16 %v476
    %v677 = vunpack.c.l.b16 %v477
    %v678 = vunpack.c.h.b16 %v477
    %v679 = vunpack.c.l.b16 %v478
    %v680 = vunpack.c.h.b16 %v478
    %v681 = vunpack.c.l.b16 %v479
    %v682 = vunpack.c.h.b16 %v479
    %v683 = vunpack.c.l.b16 %v480
    %v684 = vunpack.c.h.b16 %v480
    %v685 = vunpack.c.l.b16 %v481
    %v686 = vunpack.c.h.b16 %v481
    %v687 = vunpack.c.l.b16 %v482
    %v688 = vunpack.c.h.b16 %v482
    %v689 = vunpack.c.l.b16 %v483
    %v690 = vunpack.c.h.b16 %v483
    %v691 = vunpack.c.l.b16 %v484
    %v692 = vunpack.c.h.b16 %v484
    %v693 = vunpack.c.l.b16 %v485
    %v694 = vunpack.c.h.b16 %v485
    %v695 = vpack.c.b16 %v633, %v631
    %v696 = vpack.c.b16 %v634, %v632
    %v697 = vpack.c.b16 %v637, %v635
    %v698 = vpack.c.b16 %v638, %v636
    %v699 = vpack.c.b16 %v641, %v639
    %v700 = vpack.c.b16 %v642, %v640
    %v701 = vpack.c.b16 %v645, %v643
    %v702 = vpack.c.b16 %v646, %v644
    %v703 = vpack.c.b16 %v649, %v647
    %v704 = vpack.c.b16 %v650, %v648
    %v705 = vpack.c.b16 %v653, %v651
    %v706 = vpack.c.b16 %v654, %v652
    %v707 = vpack.c.b16 %v657, %v655
    %v708 = vpack.c.b16 %v658, %v656
    %v709 = vpack.c.b16 %v661, %v659
    %v710 = vpack.c.b16 %v662, %v660
    %v711 = vpack.c.b16 %v665, %v663
    %v712 = vpack.c.b16 %v666, %v664
    %v713 = vpack.c.b16 %v669, %v667
    %v714 = vpack.c.b16 %v670, %v668
    %v715 = vpack.c.b16 %v673, %v671
    %v716 = vpack.c.b16 %v674, %v672
    %v717 = vpack.c.b16 %v677, %v675
    %v718 = vpack.c.b16 %v678, %v676
    %v719 = vpack.c.b16 %v681, %v679
    %v720 = vpack.c.b16 %v682, %v680
    %v721 = vpack.c.b16 %v685, %v683
    %v722 = vpack.c.b16 %v686, %v684
    %v723 = vpack.c.b16 %v689, %v687
    %v724 = vpack.c.b16 %v690, %v688
    %v725 = vpack.c.b16 %v693, %v691
    %v726 = vpack.c.b16 %v694, %v692
    %759 = vmatprep.subr.bf16.mxu0 %v696
    %760 = vmatpush1.bf16.msra.mxu0 %v695
    %761 = vmatprep.subr.bf16.mxu0 %v698
    %762 = vmatpush1.bf16.msra.mxu0 %v697
    %763 = vmatprep.subr.bf16.mxu0 %v700
    %764 = vmatpush1.bf16.msra.mxu0 %v699
    %765 = vmatprep.subr.bf16.mxu0 %v702
    %766 = vmatpush1.bf16.msra.mxu0 %v701
    %767 = vmatprep.subr.bf16.mxu0 %v704
    %768 = vmatpush1.bf16.msra.mxu0 %v703
    %769 = vmatprep.subr.bf16.mxu0 %v706
    %770 = vmatpush1.bf16.msra.mxu0 %v705
    %771 = vmatprep.subr.bf16.mxu0 %v708
    %772 = vmatpush1.bf16.msra.mxu0 %v707
    %773 = vmatprep.subr.bf16.mxu0 %v710
    %774 = vmatpush1.bf16.msra.mxu0 %v709
    %775 = vmatprep.subr.bf16.mxu0 %v712
    %776 = vmatpush1.bf16.msra.mxu0 %v711
    %777 = vmatprep.subr.bf16.mxu0 %v714
    %778 = vmatpush1.bf16.msra.mxu0 %v713
    %779 = vmatprep.subr.bf16.mxu0 %v716
    %780 = vmatpush1.bf16.msra.mxu0 %v715
    %781 = vmatprep.subr.bf16.mxu0 %v718
    %782 = vmatpush1.bf16.msra.mxu0 %v717
    %783 = vmatprep.subr.bf16.mxu0 %v720
    %784 = vmatpush1.bf16.msra.mxu0 %v719
    %785 = vmatprep.subr.bf16.mxu0 %v722
    %786 = vmatpush1.bf16.msra.mxu0 %v721
    %787 = vmatprep.subr.bf16.mxu0 %v724
    %788 = vmatpush1.bf16.msra.mxu0 %v723
    %789 = vmatprep.subr.bf16.mxu0 %v726
    %790 = vmatpush1.bf16.msra.mxu0 %v725
    %791 = vmatprep.mubr.bf16.mxu0 %v453
    %792 = vmatmul.mubr.bf16.gmra.mrb[0].mxu0 %v452
    %v793 = vpop.f32.mrb[0].mxu0
    %v794 = vadd.f32 %v593, %v793
    %v795 = vpop.f32.mrb[0].mxu0
    %v796 = vadd.f32 %v595, %v795
    %v797 = vpop.f32.mrb[0].mxu0
    %v798 = vpop.f32.mrb[0].mxu0
    %799 = vdwg.mxu0
    %v800 = vld [vmem:[%s13] sm:$0x3]
    %v802 = vlaneseq
    %v803 = vshrl.u32 %v802, 7
    %v804 = vsub.s32 0, %v803
    %v805 = vrot.slane %v800, %v804
    %v806 = vlaneseq
    %v807 = vshrl.u32 %v806, 7
    %v808 = vsub.s32 1, %v807
    %v809 = vrot.slane %v800, %v808
    %v812 = vadd.f32 %v794, %v805
    %v813 = vadd.f32 %v796, %v809
    %vm814 = vcmp.ge.f32.partialorder %v812, 0.0
    %vm815 = vcmp.ge.f32.partialorder %v813, 0.0
    %v816 = vmul.f32 %v812, 0.01
    %v817 = vmul.f32 %v813, 0.01
    %v818 = vsel %vm814, %v812, %v816
    %v819 = vsel %vm815, %v813, %v817
    %v820 = vpack.c.bf16 %v818, %v818
    %v821 = vpack.c.bf16 %v819, %v819
    %v822 = vld [vmem:[%s7] sm:$0xf]
    %v823 = vld [vmem:[%s7 + $0x4] sm:$0xf]
    %v824 = vld [vmem:[%s7 + $0x8] sm:$0xf]
    %v825 = vld [vmem:[%s7 + $0xc] sm:$0xf]
    %v826 = vld [vmem:[%s7 + $0x10] sm:$0xf]
    %v827 = vld [vmem:[%s7 + $0x14] sm:$0xf]
    %v828 = vld [vmem:[%s7 + $0x18] sm:$0xf]
    %v829 = vld [vmem:[%s7 + $0x1c] sm:$0xf]
    %v830 = vld [vmem:[%s7 + $0x20] sm:$0xf]
    %v831 = vld [vmem:[%s7 + $0x24] sm:$0xf]
    %v832 = vld [vmem:[%s7 + $0x28] sm:$0xf]
    %v833 = vld [vmem:[%s7 + $0x2c] sm:$0xf]
    %v834 = vld [vmem:[%s7 + $0x30] sm:$0xf]
    %v835 = vld [vmem:[%s7 + $0x34] sm:$0xf]
    %v836 = vld [vmem:[%s7 + $0x38] sm:$0xf]
    %v837 = vld [vmem:[%s7 + $0x3c] sm:$0xf]
    %v838 = vld [vmem:[%s7 + $0x40] sm:$0xf]
    %v839 = vld [vmem:[%s7 + $0x44] sm:$0xf]
    %v840 = vld [vmem:[%s7 + $0x48] sm:$0xf]
    %v841 = vld [vmem:[%s7 + $0x4c] sm:$0xf]
    %v842 = vld [vmem:[%s7 + $0x50] sm:$0xf]
    %v843 = vld [vmem:[%s7 + $0x54] sm:$0xf]
    %v844 = vld [vmem:[%s7 + $0x58] sm:$0xf]
    %v845 = vld [vmem:[%s7 + $0x5c] sm:$0xf]
    %v846 = vld [vmem:[%s7 + $0x60] sm:$0xf]
    %v847 = vld [vmem:[%s7 + $0x64] sm:$0xf]
    %v848 = vld [vmem:[%s7 + $0x68] sm:$0xf]
    %v849 = vld [vmem:[%s7 + $0x6c] sm:$0xf]
    %v850 = vld [vmem:[%s7 + $0x70] sm:$0xf]
    %v851 = vld [vmem:[%s7 + $0x74] sm:$0xf]
    %v852 = vld [vmem:[%s7 + $0x78] sm:$0xf]
    %v853 = vld [vmem:[%s7 + $0x7c] sm:$0xf]
    %v854 = vld [vmem:[%s8] sm:$0xf]
    %v855 = vld [vmem:[%s8 + $0x4] sm:$0xf]
    %v856 = vld [vmem:[%s8 + $0x8] sm:$0xf]
    %v857 = vld [vmem:[%s8 + $0xc] sm:$0xf]
    %v858 = vld [vmem:[%s8 + $0x10] sm:$0xf]
    %v859 = vld [vmem:[%s8 + $0x14] sm:$0xf]
    %v860 = vld [vmem:[%s8 + $0x18] sm:$0xf]
    %v861 = vld [vmem:[%s8 + $0x1c] sm:$0xf]
    %v862 = vld [vmem:[%s8 + $0x20] sm:$0xf]
    %v863 = vld [vmem:[%s8 + $0x24] sm:$0xf]
    %v864 = vld [vmem:[%s8 + $0x28] sm:$0xf]
    %v865 = vld [vmem:[%s8 + $0x2c] sm:$0xf]
    %v878 = vunpack.c.l.b16 %v854
    %v879 = vunpack.c.l.b16 %v855
    %v880 = vunpack.c.l.b16 %v856
    %v881 = vunpack.c.l.b16 %v857
    %v882 = vunpack.c.l.b16 %v858
    %v883 = vunpack.c.l.b16 %v859
    %v884 = vunpack.c.l.b16 %v860
    %v885 = vunpack.c.l.b16 %v861
    %v886 = vunpack.c.l.b16 %v862
    %v887 = vunpack.c.l.b16 %v863
    %v888 = vunpack.c.l.b16 %v864
    %v889 = vunpack.c.l.b16 %v865
    %v890 = vpack.c.b16 %v879, %v878
    %v891 = vpack.c.b16 %v881, %v880
    %v892 = vpack.c.b16 %v883, %v882
    %v893 = vpack.c.b16 %v885, %v884
    %v894 = vpack.c.b16 %v887, %v886
    %v895 = vpack.c.b16 %v889, %v888
    %902 = vmatprep.subr.bf16.mxu0 0
    %903 = vmatpush1.bf16.msra.mxu0 %v890
    %904 = vmatprep.subr.bf16.mxu0 0
    %905 = vmatpush1.bf16.msra.mxu0 %v891
    %906 = vmatprep.subr.bf16.mxu0 0
    %907 = vmatpush1.bf16.msra.mxu0 %v892
    %908 = vmatprep.subr.bf16.mxu0 0
    %909 = vmatpush1.bf16.msra.mxu0 %v893
    %910 = vmatprep.subr.bf16.mxu0 0
    %911 = vmatpush1.bf16.msra.mxu0 %v894
    %912 = vmatprep.subr.bf16.mxu0 0
    %913 = vmatpush1.bf16.msra.mxu0 %v895
    %914 = vmatprep.subr.bf16.mxu0 0
    %915 = vmatpush1.bf16.msra.mxu0 0
    %916 = vmatprep.subr.bf16.mxu0 0
    %917 = vmatpush1.bf16.msra.mxu0 0
    %918 = vmatprep.subr.bf16.mxu0 0
    %919 = vmatpush1.bf16.msra.mxu0 0
    %920 = vmatprep.subr.bf16.mxu0 0
    %921 = vmatpush1.bf16.msra.mxu0 0
    %922 = vmatprep.subr.bf16.mxu0 0
    %923 = vmatpush1.bf16.msra.mxu0 0
    %924 = vmatprep.subr.bf16.mxu0 0
    %925 = vmatpush1.bf16.msra.mxu0 0
    %926 = vmatprep.subr.bf16.mxu0 0
    %927 = vmatpush1.bf16.msra.mxu0 0
    %928 = vmatprep.subr.bf16.mxu0 0
    %929 = vmatpush1.bf16.msra.mxu0 0
    %930 = vmatprep.subr.bf16.mxu0 0
    %931 = vmatpush1.bf16.msra.mxu0 0
    %932 = vmatprep.subr.bf16.mxu0 0
    %933 = vmatpush1.bf16.msra.mxu0 0
    %934 = vmatprep.mubr.bf16.mxu0 0
    %935 = vmatmul.mubr.bf16.gmra.mrb[0].mxu0 %v217
    %v936 = vpop.f32.mrb[0].mxu0
    %v937 = vadd.f32 0.0, %v936
    %v938 = vpop.f32.mrb[0].mxu0
    %v939 = vpop.f32.mrb[0].mxu0
    %v940 = vpop.f32.mrb[0].mxu0
    %941 = vdwg.mxu0
    %v974 = vunpack.c.l.b16 %v822
    %v975 = vunpack.c.l.b16 %v823
    %v976 = vunpack.c.l.b16 %v824
    %v977 = vunpack.c.l.b16 %v825
    %v978 = vunpack.c.l.b16 %v826
    %v979 = vunpack.c.l.b16 %v827
    %v980 = vunpack.c.l.b16 %v828
    %v981 = vunpack.c.l.b16 %v829
    %v982 = vunpack.c.l.b16 %v830
    %v983 = vunpack.c.l.b16 %v831
    %v984 = vunpack.c.l.b16 %v832
    %v985 = vunpack.c.l.b16 %v833
    %v986 = vunpack.c.l.b16 %v834
    %v987 = vunpack.c.l.b16 %v835
    %v988 = vunpack.c.l.b16 %v836
    %v989 = vunpack.c.l.b16 %v837
    %v990 = vunpack.c.l.b16 %v838
    %v991 = vunpack.c.l.b16 %v839
    %v992 = vunpack.c.l.b16 %v840
    %v993 = vunpack.c.l.b16 %v841
    %v994 = vunpack.c.l.b16 %v842
    %v995 = vunpack.c.l.b16 %v843
    %v996 = vunpack.c.l.b16 %v844
    %v997 = vunpack.c.l.b16 %v845
    %v998 = vunpack.c.l.b16 %v846
    %v999 = vunpack.c.l.b16 %v847
    %v1000 = vunpack.c.l.b16 %v848
    %v1001 = vunpack.c.l.b16 %v849
    %v1002 = vunpack.c.l.b16 %v850
    %v1003 = vunpack.c.l.b16 %v851
    %v1004 = vunpack.c.l.b16 %v852
    %v1005 = vunpack.c.l.b16 %v853
    %v1006 = vpack.c.b16 %v975, %v974
    %v1007 = vpack.c.b16 %v977, %v976
    %v1008 = vpack.c.b16 %v979, %v978
    %v1009 = vpack.c.b16 %v981, %v980
    %v1010 = vpack.c.b16 %v983, %v982
    %v1011 = vpack.c.b16 %v985, %v984
    %v1012 = vpack.c.b16 %v987, %v986
    %v1013 = vpack.c.b16 %v989, %v988
    %v1014 = vpack.c.b16 %v991, %v990
    %v1015 = vpack.c.b16 %v993, %v992
    %v1016 = vpack.c.b16 %v995, %v994
    %v1017 = vpack.c.b16 %v997, %v996
    %v1018 = vpack.c.b16 %v999, %v998
    %v1019 = vpack.c.b16 %v1001, %v1000
    %v1020 = vpack.c.b16 %v1003, %v1002
    %v1021 = vpack.c.b16 %v1005, %v1004
    %1038 = vmatprep.subr.bf16.mxu0 0
    %1039 = vmatpush1.bf16.msra.mxu0 %v1006
    %1040 = vmatprep.subr.bf16.mxu0 0
    %1041 = vmatpush1.bf16.msra.mxu0 %v1007
    %1042 = vmatprep.subr.bf16.mxu0 0
    %1043 = vmatpush1.bf16.msra.mxu0 %v1008
    %1044 = vmatprep.subr.bf16.mxu0 0
    %1045 = vmatpush1.bf16.msra.mxu0 %v1009
    %1046 = vmatprep.subr.bf16.mxu0 0
    %1047 = vmatpush1.bf16.msra.mxu0 %v1010
    %1048 = vmatprep.subr.bf16.mxu0 0
    %1049 = vmatpush1.bf16.msra.mxu0 %v1011
    %1050 = vmatprep.subr.bf16.mxu0 0
    %1051 = vmatpush1.bf16.msra.mxu0 %v1012
    %1052 = vmatprep.subr.bf16.mxu0 0
    %1053 = vmatpush1.bf16.msra.mxu0 %v1013
    %1054 = vmatprep.subr.bf16.mxu0 0
    %1055 = vmatpush1.bf16.msra.mxu0 %v1014
    %1056 = vmatprep.subr.bf16.mxu0 0
    %1057 = vmatpush1.bf16.msra.mxu0 %v1015
    %1058 = vmatprep.subr.bf16.mxu0 0
    %1059 = vmatpush1.bf16.msra.mxu0 %v1016
    %1060 = vmatprep.subr.bf16.mxu0 0
    %1061 = vmatpush1.bf16.msra.mxu0 %v1017
    %1062 = vmatprep.subr.bf16.mxu0 0
    %1063 = vmatpush1.bf16.msra.mxu0 %v1018
    %1064 = vmatprep.subr.bf16.mxu0 0
    %1065 = vmatpush1.bf16.msra.mxu0 %v1019
    %1066 = vmatprep.subr.bf16.mxu0 0
    %1067 = vmatpush1.bf16.msra.mxu0 %v1020
    %1068 = vmatprep.subr.bf16.mxu0 0
    %1069 = vmatpush1.bf16.msra.mxu0 %v1021
    %1070 = vmatprep.mubr.bf16.mxu0 %v821
    %1071 = vmatmul.mubr.bf16.gmra.mrb[0].mxu0 %v820
    %v1072 = vpop.f32.mrb[0].mxu0
    %v1073 = vadd.f32 %v937, %v1072
    %v1074 = vpop.f32.mrb[0].mxu0
    %v1075 = vpop.f32.mrb[0].mxu0
    %v1076 = vpop.f32.mrb[0].mxu0
    %1077 = vdwg.mxu0
    %v1078 = vld [vmem:[%s14] sm:$0x1]
    %v1080 = vlaneseq
    %v1081 = vshrl.u32 %v1080, 7
    %v1082 = vsub.s32 0, %v1081
    %v1083 = vrot.slane %v1078, %v1082
    %v1085 = vadd.f32 %v1073, %v1083
    %v1086 = vsub.f32 0.0, %v1085
    %v1087 = vmul.f32 %v1086, 1.442695
    %v1088 = vpow.pop %v1087
    %v1089 = vadd.f32 %v1088, 1.0
    %v1090 = vrcp.pop %v1089
    %vm1091 = vcmask 254976
    %1092 = vst.msk [vmem:[%s15] sm:$0x3] %vm1091, %v1090
    // Predicated region
    $region74: #{forward.1} parent=1 // pred_check
      _
    $region75: #{forward.1} parent=1 // pred_check_branch
      %1094 = sbr.rel (0) target = $region77
    $region76: #{forward.1} parent=1 // pred_region
      _
    $region77: #{forward.1} parent=1 // pred_fallthru
      _
    // Predicated region
    $region78: #{forward.1} parent=1 // pred_check
      _
    $region79: #{forward.1} parent=1 // pred_check_branch
      %1096 = sbr.rel (0) target = $region81
    $region80: #{forward.1} parent=1 // pred_region
      _
    $region81: #{forward.1} parent=1 // pred_fallthru
      _
    %1097 = vsyncpa [#allocation3], 1
    %1098 = vsyncpa [#allocation5], 1

</llo_original>
